<compile_context>
chip_gen: v7x
topology: tpu7x:2x2x1
jax: 0.10.0
libtpu: 0.0.40
codegen_flags: <defaults>
</compile_context>

<pallas_src>
import math

import jax
import jax.numpy as jnp
from jax.experimental import pallas as pl
from jax.experimental.pallas import tpu as pltpu

_MIB = 1024 * 1024


def _round_up(v, m):
    return (v + m - 1) // m * m


def _vmem_capacity_bytes():
    try:
        return int(pltpu.get_tpu_info().vmem_capacity_bytes)
    except Exception:  # pragma: no cover - interpret / unknown backend
        return 128 * _MIB


def _nk_tiles(N, K):
    """Lane / contraction tiles: multiples of 256 (full 256x256 MXU pushes on
    v6e/v7x), large tn (bandwidth lever), modest tk (only costs VMEM)."""
    tn = min(2048, _round_up(N, 256))
    tk = min(512, _round_up(K, 256))
    return tn, tk


def _m_tile_and_vmem(M, tn, tk, in_itemsize):
    """Generation-aware sublane tile + scoped-VMEM request.

    HBM read traffic ~ M*K*(N/tn) + K*N*(M/tm): bigger tm/tn => less traffic.
    """
    cap = _vmem_capacity_bytes()
    if cap <= 80 * _MIB:
        # v7x: 64 MiB VMEM per TensorCore - leave headroom for Mosaic scratch.
        target_tm, gen_cap = 1024, 52 * _MIB
    else:
        # v5e / v6e: 128 MiB VMEM.
        target_tm, gen_cap = 2048, 100 * _MIB

    tm = min(target_tm, _round_up(M, 8))

    def need(tm_):
        return (2 * (tm_ * tk + tk * tn) * in_itemsize   # x / w_t double buffers
                + 2 * tn * 4                              # bias
                + 2 * tm_ * tn * 4)                       # f32 output tile (dbuf)

    while tm > 8 and need(tm) > gen_cap:
        tm = max(8, _round_up(tm // 2, 8))

    vmem_limit = int(min(max(need(tm) * 3 // 2, 32 * _MIB), gen_cap))
    return tm, vmem_limit


def _linear_kernel(x_ref, w_ref, b_ref, o_ref):
    """One (tm, tn) output tile; K is the last ("arbitrary") grid axis.

    The f32 output tile is VMEM-resident across the K axis, so we accumulate
    directly into it; bias is added only on the last K step."""
    @pl.when(pl.program_id(2) == 0)
    def _():
        o_ref[...] = jnp.zeros_like(o_ref)

    o_ref[...] += jnp.dot(
        x_ref[...], w_ref[...], preferred_element_type=jnp.float32
    )

    @pl.when(pl.program_id(2) == pl.num_programs(2) - 1)
    def _():
        o_ref[...] += b_ref[...]


def prepare_linear_params(weight, bias, compute_dtype=jnp.bfloat16):
    """One-time prep of nn.Linear params: transpose [out,in]->[K,N], cast to
    the compute dtype, zero-pad to the tile grid.  Doing this once at init
    avoids a per-forward HBM pass over the (multi-hundred-MiB) weight."""
    N, K = weight.shape
    w_t = weight.T                               # [K, N]
    if compute_dtype is not None:
        w_t = w_t.astype(compute_dtype)
    b = bias.astype(jnp.float32)
    tn, tk = _nk_tiles(N, K)
    Kp, Np = _round_up(K, tk), _round_up(N, tn)
    if (Kp, Np) != (K, N):
        w_t = jnp.pad(w_t, ((0, Kp - K), (0, Np - N)))
        b = jnp.pad(b, (0, Np - N))
    return w_t, b, N


def pallas_linear(x, w_t, b, *, n_out=None, compute_dtype=jnp.bfloat16,
                  tm=None, tn=None, tk=None):
    """y = x @ w_t + b  (torch.nn.Linear forward), f32 output.

    x:   [..., K]
    w_t: [Kw, Nw]  transposed (optionally pre-cast / pre-padded) weight, Kw >= K
    b:   [Nw]      bias (f32), padded to match w_t
    n_out: logical output width (defaults to Nw)
    compute_dtype: dtype fed to the MXU (default bf16); accumulation is f32.
    """
    orig_lead = x.shape[:-1]
    K = x.shape[-1]
    M = math.prod(orig_lead) if orig_lead else 1
    Kw, Nw = w_t.shape
    n_out = Nw if n_out is None else n_out
    assert K <= Kw and b.shape == (Nw,) and n_out <= Nw

    x2 = x.reshape(M, K)
    if compute_dtype is not None:
        x2 = x2.astype(compute_dtype)
        if w_t.dtype != compute_dtype:     # prepared weights skip this cast
            w_t = w_t.astype(compute_dtype)
    b = b.astype(jnp.float32)
    in_itemsize = x2.dtype.itemsize

    # ---- Tile selection (generation-aware; see helpers) ---------------------
    tn_d, tk_d = _nk_tiles(Nw, Kw)
    tn = tn_d if tn is None else tn
    tk = tk_d if tk is None else tk
    tm_d, vmem_limit = _m_tile_and_vmem(M, tn, tk, in_itemsize)
    tm = tm_d if tm is None else tm

    # ---- Zero-pad so tiles divide exactly (zeros are exact for matmul).
    #      With prepared weights the weight/bias pads are no-ops. ------------
    Mp, Np, Kp = _round_up(M, tm), _round_up(Nw, tn), _round_up(Kw, tk)
    if Mp != M or Kp != K:
        x2 = jnp.pad(x2, ((0, Mp - M), (0, Kp - K)))
    if Kp != Kw or Np != Nw:
        w_t = jnp.pad(w_t, ((0, Kp - Kw), (0, Np - Nw)))
        b = jnp.pad(b, (0, Np - Nw))
    b2d = b.reshape(1, Np)

    grid = (Mp // tm, Np // tn, Kp // tk)

    out = pl.pallas_call(
        _linear_kernel,
        out_shape=jax.ShapeDtypeStruct((Mp, Np), jnp.float32),
        grid_spec=pltpu.PrefetchScalarGridSpec(
            num_scalar_prefetch=0,
            grid=grid,
            in_specs=[
                pl.BlockSpec((tm, tk), lambda i, j, k: (i, k)),   # x tile
                pl.BlockSpec((tk, tn), lambda i, j, k: (k, j)),   # w_t tile
                pl.BlockSpec((1, tn), lambda i, j, k: (0, j)),    # bias tile
            ],
            out_specs=pl.BlockSpec((tm, tn), lambda i, j, k: (i, j)),
        ),
        compiler_params=pltpu.CompilerParams(
            dimension_semantics=("parallel", "parallel", "arbitrary"),
            vmem_limit_bytes=vmem_limit,
        ),
    )(x2, w_t, b2d)

    out = out[:M, :n_out]
    return out.reshape(*orig_lead, n_out)


class MatMulNcclPallas:
    """Pallas equivalent of MatMulNccl's compute: one square Linear(dim, dim)."""

    def __init__(self, dim, key, *, compute_dtype=jnp.bfloat16):
        kw, kb = jax.random.split(key)
        # Deterministic init mimicking nn.Linear's uniform(-1/sqrt(dim), 1/sqrt(dim)).
        bound = 1.0 / math.sqrt(dim)
        # PyTorch stores weight as [out, in]; keep that convention.
        self.weight = jax.random.uniform(kw, (dim, dim), jnp.float32, -bound, bound)
        self.bias = jax.random.uniform(kb, (dim,), jnp.float32, -bound, bound)
        self.compute_dtype = compute_dtype
        # One-time transpose / cast / pad of the weight (per-forward casting
        # of the ~576 MiB production weight would cost a full HBM pass).
        self.w_t, self.b_pad, self.n_out = prepare_linear_params(
            self.weight, self.bias, compute_dtype
        )

    def __call__(self, x, y=None):
        # TODO(synk): torch.distributed.all_reduce(y) on a side CUDA stream,
        # torch.cuda.Event timing (the module returns time_pool), and the
        # rank-indexed comm buffer have no single-device Pallas equivalent;
        # only the meaningful compute (x = self.fc(x), micro_iter = 1) is here.
        micro_iter = 1
        for _ in range(micro_iter):
            x = pallas_linear(
                x, self.w_t, self.b_pad,
                n_out=self.n_out, compute_dtype=self.compute_dtype,
            )
        return x


if __name__ == "__main__":
    # Small stand-ins for the production shapes (batch=4, seq_len=2048, dim=12288).
    batch, seq_len, dim = 2, 8, 256

    key = jax.random.PRNGKey(0)
    k_x, k_p = jax.random.split(key)
    x = jax.random.normal(k_x, (batch, seq_len, dim), dtype=jnp.float32)

    # f32 compute path (exact vs. reference).
    model_f32 = MatMulNcclPallas(dim, k_p, compute_dtype=None)
    y_f32 = jax.block_until_ready(model_f32(x))

    y_ref = x @ model_f32.weight.T + model_f32.bias
    assert y_f32.shape == y_ref.shape
    assert jnp.allclose(y_f32, y_ref, atol=1e-4, rtol=1e-4), "f32 mismatch vs reference"

    # Default bf16 compute path (halves HBM traffic; f32 MXU accumulation, f32 out).
    model = MatMulNcclPallas(dim, k_p)
    y = jax.block_until_ready(model(x))
    assert y.shape == y_ref.shape
    assert jnp.allclose(y, y_ref, atol=5e-2, rtol=5e-2), "bf16 mismatch vs reference"

    print("KERNEL_OK")
</pallas_src>

<mosaic_0001>
module attributes {stable_mosaic.version = 11 : i64} {
  func.func @_linear_kernel(%arg0: i32, %arg1: i32, %arg2: i32, %arg3: memref<16x256xf32, #tpu.memory_space<vmem>>, %arg4: memref<256x256xf32, #tpu.memory_space<vmem>>, %arg5: memref<1x256xf32, #tpu.memory_space<vmem>>, %arg6: memref<16x256xf32, #tpu.memory_space<vmem>>) attributes {dimension_semantics = [#tpu.dimension_semantics<parallel>, #tpu.dimension_semantics<parallel>, #tpu.dimension_semantics<arbitrary>], iteration_bounds = array<i64: 1, 1, 1>, scalar_prefetch = 0 : i64, scratch_operands = 0 : i64, tpu.core_type = #tpu.core_type<tc>, window_params = [{transform_indices = @transform_0, window_bounds = array<i64: 16, 256>}, {transform_indices = @transform_1, window_bounds = array<i64: 256, 256>}, {transform_indices = @transform_2, window_bounds = array<i64: 1, 256>}, {transform_indices = @transform_3, window_bounds = array<i64: 16, 256>}]} {
    %c0_i32 = arith.constant 0 : i32
    %0 = arith.cmpi eq, %arg2, %c0_i32 : i32
    %1 = arith.extui %0 : i1 to i32
    %c0_i32_0 = arith.constant 0 : i32
    %2 = arith.cmpi ne, %1, %c0_i32_0 : i32
    scf.if %2 {
      %cst_10 = arith.constant 0.000000e+00 : f32
      %12 = vector.broadcast %cst_10 : f32 to vector<16x256xf32>
      %c0_11 = arith.constant 0 : index
      %c0_12 = arith.constant 0 : index
      %13 = vector.load %arg6[%c0_11, %c0_12] : memref<16x256xf32, #tpu.memory_space<vmem>>, vector<16x256xf32>
      tpu.vector_store %arg6[%c0_11, %c0_12], %12 {strides = array<i32>} : memref<16x256xf32, #tpu.memory_space<vmem>>, vector<16x256xf32>,
    } else {
    }
    %c0 = arith.constant 0 : index
    %c0_1 = arith.constant 0 : index
    %3 = vector.load %arg6[%c0, %c0_1] : memref<16x256xf32, #tpu.memory_space<vmem>>, vector<16x256xf32>
    %c0_2 = arith.constant 0 : index
    %c0_3 = arith.constant 0 : index
    %4 = vector.load %arg3[%c0_2, %c0_3] : memref<16x256xf32, #tpu.memory_space<vmem>>, vector<16x256xf32>
    %c0_4 = arith.constant 0 : index
    %c0_5 = arith.constant 0 : index
    %5 = vector.load %arg4[%c0_4, %c0_5] : memref<256x256xf32, #tpu.memory_space<vmem>>, vector<256x256xf32>
    %cst = arith.constant dense<0.000000e+00> : vector<16x256xf32>
    %6 = tpu.matmul %4, %5, %cst {dimension_numbers = #tpu.dot_dimension_numbers<[1], [0], [0], [1], [0, 0, 1, 1], [], []>} : vector<16x256xf32>, vector<256x256xf32>, vector<16x256xf32> -> vector<16x256xf32>
    %7 = arith.addf %3, %6 : vector<16x256xf32>
    %c0_6 = arith.constant 0 : index
    %c0_7 = arith.constant 0 : index
    %8 = vector.load %arg6[%c0_6, %c0_7] : memref<16x256xf32, #tpu.memory_space<vmem>>, vector<16x256xf32>
    tpu.vector_store %arg6[%c0_6, %c0_7], %7 {strides = array<i32>} : memref<16x256xf32, #tpu.memory_space<vmem>>, vector<16x256xf32>,
    %c0_i32_8 = arith.constant 0 : i32
    %9 = arith.cmpi eq, %arg2, %c0_i32_8 : i32
    %10 = arith.extui %9 : i1 to i32
    %c0_i32_9 = arith.constant 0 : i32
    %11 = arith.cmpi ne, %10, %c0_i32_9 : i32
    scf.if %11 {
      %c0_10 = arith.constant 0 : index
      %c0_11 = arith.constant 0 : index
      %12 = vector.load %arg6[%c0_10, %c0_11] : memref<16x256xf32, #tpu.memory_space<vmem>>, vector<16x256xf32>
      %c0_12 = arith.constant 0 : index
      %c0_13 = arith.constant 0 : index
      %13 = vector.load %arg5[%c0_12, %c0_13] : memref<1x256xf32, #tpu.memory_space<vmem>>, vector<1x256xf32>
      %14 = vector.broadcast %13 : vector<1x256xf32> to vector<16x256xf32>
      %15 = arith.addf %12, %14 : vector<16x256xf32>
      %c0_14 = arith.constant 0 : index
      %c0_15 = arith.constant 0 : index
      %16 = vector.load %arg6[%c0_14, %c0_15] : memref<16x256xf32, #tpu.memory_space<vmem>>, vector<16x256xf32>
      tpu.vector_store %arg6[%c0_14, %c0_15], %15 {strides = array<i32>} : memref<16x256xf32, #tpu.memory_space<vmem>>, vector<16x256xf32>,
    } else {
    }
    return
  }
  func.func @transform_0(%arg0: i32, %arg1: i32, %arg2: i32) -> (i32, i32) {
    %c0_i32 = arith.constant 0 : i32
    return %arg0, %arg2 : i32, i32
  }
  func.func @transform_1(%arg0: i32, %arg1: i32, %arg2: i32) -> (i32, i32) {
    %c0_i32 = arith.constant 0 : i32
    return %arg2, %arg1 : i32, i32
  }
  func.func @transform_2(%arg0: i32, %arg1: i32, %arg2: i32) -> (i32, i32) {
    %c0_i32 = arith.constant 0 : i32
    %c0_i32_0 = arith.constant 0 : i32
    return %c0_i32, %arg1 : i32, i32
  }
  func.func @transform_3(%arg0: i32, %arg1: i32, %arg2: i32) -> (i32, i32) {
    %c0_i32 = arith.constant 0 : i32
    return %arg0, %arg1 : i32, i32
  }
}

</mosaic_0001>

<llo_original>
// kernel: tpu_custom_call.1
$region0: #{tpu_custom_call.1}
  #allocation0 [shape = 'u32[]', space=smem, size = 0x4, offset = 0x4, fixed_abs, tag = 'smem constant byte address 0x4 - core index']
  #allocation1 [shape = 'u32[144,128]{1,0:T(1,128)}', space=vmem, size = 0x12000, scoped, tag = 'internal scratch']
  %s0 = inlined_call_operand.hbm [shape: f32[16,256], index: 0, kind: input, shape index: {}]
  %s1 = inlined_call_operand.hbm [shape: f32[256,256], index: 1, kind: input, shape index: {}]
  %s2 = inlined_call_operand.vmem [shape: f32[1,256], index: 2, kind: input, shape index: {}]
  %s3 = inlined_call_operand.hbm [shape: f32[16,256], index: 3, kind: output, shape index: {}]
  %s4 = sld [smem:[#allocation0]]
  $region38: #{tpu_custom_call.1} parent=0
    _
  %s6 = ssub.s32 1, %s4
  %s7 = scalar_select 0, %s6, %s4
  $region1: #{tpu_custom_call.1} parent=0
    #allocation2 [shape = 'u8[16384]{0}', space=vmem, size = 0x4000, scoped, tag = 'input window, operand 0, single buffered']
    #allocation3 [shape = 's32[1]{0}', space=sflag, size = 0x4, scoped, tag = 'scoped memory for tpu_custom_call.1']
    #allocation4 [shape = 's32[1]{0}', space=sflag, size = 0x4, scoped, tag = 'scoped memory for tpu_custom_call.1']
    #allocation5 [shape = 'u8[262144]{0}', space=vmem, size = 0x40000, scoped, tag = 'input window, operand 1, single buffered']
    #allocation6 [shape = 's32[1]{0}', space=sflag, size = 0x4, scoped, tag = 'scoped memory for tpu_custom_call.1']
    #allocation7 [shape = 'u8[16384]{0}', space=vmem, size = 0x4000, scoped, tag = 'output window, operand 0, single buffered']
    %8 = vsyncpa [#allocation3], 0
    %9 = vsyncpa [#allocation6], 0
    %10 = vsyncpa [#allocation4], 0
    // Predicated region
    $region2: #{tpu_custom_call.1} parent=1 // pred_check
      _
    $region3: #{tpu_custom_call.1} parent=1 // pred_check_branch
      %12 = sbr.rel (0) target = $region5
    $region4: #{tpu_custom_call.1} parent=1 // pred_region
      %s14 = ssub.s32 512, 512
      %15 = vsyncadd [#allocation3], %s14
      %s16 = sshll.u32 [#allocation2], 4
      %s17 = int_to_ptr.vmem [resolvable:$true] %s16
      %22 = dma.hbm_to_vmem [thread:$0]  %s0, 512, %s17, [#allocation3], 256, 256, 16
    $region5: #{tpu_custom_call.1} parent=1 // pred_fallthru
      _
    // Predicated region
    $region6: #{tpu_custom_call.1} parent=1 // pred_check
      _
    $region7: #{tpu_custom_call.1} parent=1 // pred_check_branch
      %24 = sbr.rel (0) target = $region9
    $region8: #{tpu_custom_call.1} parent=1 // pred_region
      %s26 = ssub.s32 8192, 8192
      %27 = vsyncadd [#allocation6], %s26
      %s28 = sshll.u32 [#allocation5], 4
      %s29 = int_to_ptr.vmem [resolvable:$true] %s28
      %34 = dma.hbm_to_vmem [thread:$0]  %s1, 8192, %s29, [#allocation6], 256, 256, 16
    $region9: #{tpu_custom_call.1} parent=1 // pred_fallthru
      _
    // Predicated region
    $region10: #{tpu_custom_call.1} parent=1 // pred_check
      _
    $region11: #{tpu_custom_call.1} parent=1 // pred_check_branch
      %36 = sbr.rel (0) target = $region13
    $region12: #{tpu_custom_call.1} parent=1 // pred_region
      _
    $region13: #{tpu_custom_call.1} parent=1 // pred_fallthru
      _
    // Predicated region
    $region14: #{tpu_custom_call.1} parent=1 // pred_check
      _
    $region15: #{tpu_custom_call.1} parent=1 // pred_check_branch
      %38 = sbr.rel (0) target = $region17
    $region16: #{tpu_custom_call.1} parent=1 // pred_region
      %39 = dma.done [#allocation3], 512
    $region17: #{tpu_custom_call.1} parent=1 // pred_fallthru
      _
    // Predicated region
    $region18: #{tpu_custom_call.1} parent=1 // pred_check
      _
    $region19: #{tpu_custom_call.1} parent=1 // pred_check_branch
      %41 = sbr.rel (0) target = $region21
    $region20: #{tpu_custom_call.1} parent=1 // pred_region
      %42 = dma.done [#allocation6], 8192
    $region21: #{tpu_custom_call.1} parent=1 // pred_fallthru
      _
    %p43 = scmp.eq.s32.totalorder 0, 0
    // Predicated region
    $region22: #{tpu_custom_call.1} parent=1 // pred_check
      %p44 = pneg %p43
    $region23: #{tpu_custom_call.1} parent=1 // pred_check_branch
      %46 = sbr.rel (%p44) target = $region25
    $region24: #{tpu_custom_call.1} parent=1 // pred_region
      %47 = vst [vmem:[#allocation7] sm:$0xff] 0.0
      %48 = vst [vmem:[#allocation7 + $0x8] sm:$0xff] 0.0
      %49 = vst [vmem:[#allocation7 + $0x10] sm:$0xff] 0.0
      %50 = vst [vmem:[#allocation7 + $0x18] sm:$0xff] 0.0
    $region25: #{tpu_custom_call.1} parent=1 // pred_fallthru
      _
    %v51 = vld [vmem:[#allocation7] sm:$0xff]
    %v52 = vld [vmem:[#allocation7 + $0x8] sm:$0xff]
    %v53 = vld [vmem:[#allocation7 + $0x10] sm:$0xff]
    %v54 = vld [vmem:[#allocation7 + $0x18] sm:$0xff]
    %v55 = vld [vmem:[#allocation2] sm:$0xff]
    %v56 = vld [vmem:[#allocation2 + $0x8] sm:$0xff]
    %v57 = vld [vmem:[#allocation2 + $0x10] sm:$0xff]
    %v58 = vld [vmem:[#allocation2 + $0x18] sm:$0xff]
    %v59 = vld [vmem:[#allocation5] sm:$0xff]
    %v60 = vld [vmem:[#allocation5 + $0x8] sm:$0xff]
    %v61 = vld [vmem:[#allocation5 + $0x10] sm:$0xff]
    %v62 = vld [vmem:[#allocation5 + $0x18] sm:$0xff]
    %v63 = vld [vmem:[#allocation5 + $0x20] sm:$0xff]
    %v64 = vld [vmem:[#allocation5 + $0x28] sm:$0xff]
    %v65 = vld [vmem:[#allocation5 + $0x30] sm:$0xff]
    %v66 = vld [vmem:[#allocation5 + $0x38] sm:$0xff]
    %v67 = vld [vmem:[#allocation5 + $0x40] sm:$0xff]
    %v68 = vld [vmem:[#allocation5 + $0x48] sm:$0xff]
    %v69 = vld [vmem:[#allocation5 + $0x50] sm:$0xff]
    %v70 = vld [vmem:[#allocation5 + $0x58] sm:$0xff]
    %v71 = vld [vmem:[#allocation5 + $0x60] sm:$0xff]
    %v72 = vld [vmem:[#allocation5 + $0x68] sm:$0xff]
    %v73 = vld [vmem:[#allocation5 + $0x70] sm:$0xff]
    %v74 = vld [vmem:[#allocation5 + $0x78] sm:$0xff]
    %v75 = vld [vmem:[#allocation5 + $0x80] sm:$0xff]
    %v76 = vld [vmem:[#allocation5 + $0x88] sm:$0xff]
    %v77 = vld [vmem:[#allocation5 + $0x90] sm:$0xff]
    %v78 = vld [vmem:[#allocation5 + $0x98] sm:$0xff]
    %v79 = vld [vmem:[#allocation5 + $0xa0] sm:$0xff]
    %v80 = vld [vmem:[#allocation5 + $0xa8] sm:$0xff]
    %v81 = vld [vmem:[#allocation5 + $0xb0] sm:$0xff]
    %v82 = vld [vmem:[#allocation5 + $0xb8] sm:$0xff]
    %v83 = vld [vmem:[#allocation5 + $0xc0] sm:$0xff]
    %v84 = vld [vmem:[#allocation5 + $0xc8] sm:$0xff]
    %v85 = vld [vmem:[#allocation5 + $0xd0] sm:$0xff]
    %v86 = vld [vmem:[#allocation5 + $0xd8] sm:$0xff]
    %v87 = vld [vmem:[#allocation5 + $0xe0] sm:$0xff]
    %v88 = vld [vmem:[#allocation5 + $0xe8] sm:$0xff]
    %v89 = vld [vmem:[#allocation5 + $0xf0] sm:$0xff]
    %v90 = vld [vmem:[#allocation5 + $0xf8] sm:$0xff]
    %v91 = vld [vmem:[#allocation5 + $0x100] sm:$0xff]
    %v92 = vld [vmem:[#allocation5 + $0x108] sm:$0xff]
    %v93 = vld [vmem:[#allocation5 + $0x110] sm:$0xff]
    %v94 = vld [vmem:[#allocation5 + $0x118] sm:$0xff]
    %v95 = vld [vmem:[#allocation5 + $0x120] sm:$0xff]
    %v96 = vld [vmem:[#allocation5 + $0x128] sm:$0xff]
    %v97 = vld [vmem:[#allocation5 + $0x130] sm:$0xff]
    %v98 = vld [vmem:[#allocation5 + $0x138] sm:$0xff]
    %v99 = vld [vmem:[#allocation5 + $0x140] sm:$0xff]
    %v100 = vld [vmem:[#allocation5 + $0x148] sm:$0xff]
    %v101 = vld [vmem:[#allocation5 + $0x150] sm:$0xff]
    %v102 = vld [vmem:[#allocation5 + $0x158] sm:$0xff]
    %v103 = vld [vmem:[#allocation5 + $0x160] sm:$0xff]
    %v104 = vld [vmem:[#allocation5 + $0x168] sm:$0xff]
    %v105 = vld [vmem:[#allocation5 + $0x170] sm:$0xff]
    %v106 = vld [vmem:[#allocation5 + $0x178] sm:$0xff]
    %v107 = vld [vmem:[#allocation5 + $0x180] sm:$0xff]
    %v108 = vld [vmem:[#allocation5 + $0x188] sm:$0xff]
    %v109 = vld [vmem:[#allocation5 + $0x190] sm:$0xff]
    %v110 = vld [vmem:[#allocation5 + $0x198] sm:$0xff]
    %v111 = vld [vmem:[#allocation5 + $0x1a0] sm:$0xff]
    %v112 = vld [vmem:[#allocation5 + $0x1a8] sm:$0xff]
    %v113 = vld [vmem:[#allocation5 + $0x1b0] sm:$0xff]
    %v114 = vld [vmem:[#allocation5 + $0x1b8] sm:$0xff]
    %v115 = vld [vmem:[#allocation5 + $0x1c0] sm:$0xff]
    %v116 = vld [vmem:[#allocation5 + $0x1c8] sm:$0xff]
    %v117 = vld [vmem:[#allocation5 + $0x1d0] sm:$0xff]
    %v118 = vld [vmem:[#allocation5 + $0x1d8] sm:$0xff]
    %v119 = vld [vmem:[#allocation5 + $0x1e0] sm:$0xff]
    %v120 = vld [vmem:[#allocation5 + $0x1e8] sm:$0xff]
    %v121 = vld [vmem:[#allocation5 + $0x1f0] sm:$0xff]
    %v122 = vld [vmem:[#allocation5 + $0x1f8] sm:$0xff]
    %123 = vmatprep.subr.mxu0 %v60
    %124 = vmatpush1.msra.mxu0 %v59
    %125 = vmatprep.subr.mxu0 %v62
    %126 = vmatpush1.msra.mxu0 %v61
    %127 = vmatprep.subr.mxu0 %v64
    %128 = vmatpush1.msra.mxu0 %v63
    %129 = vmatprep.subr.mxu0 %v66
    %130 = vmatpush1.msra.mxu0 %v65
    %131 = vmatprep.subr.mxu0 %v68
    %132 = vmatpush1.msra.mxu0 %v67
    %133 = vmatprep.subr.mxu0 %v70
    %134 = vmatpush1.msra.mxu0 %v69
    %135 = vmatprep.subr.mxu0 %v72
    %136 = vmatpush1.msra.mxu0 %v71
    %137 = vmatprep.subr.mxu0 %v74
    %138 = vmatpush1.msra.mxu0 %v73
    %139 = vmatprep.subr.mxu0 %v76
    %140 = vmatpush1.msra.mxu0 %v75
    %141 = vmatprep.subr.mxu0 %v78
    %142 = vmatpush1.msra.mxu0 %v77
    %143 = vmatprep.subr.mxu0 %v80
    %144 = vmatpush1.msra.mxu0 %v79
    %145 = vmatprep.subr.mxu0 %v82
    %146 = vmatpush1.msra.mxu0 %v81
    %147 = vmatprep.subr.mxu0 %v84
    %148 = vmatpush1.msra.mxu0 %v83
    %149 = vmatprep.subr.mxu0 %v86
    %150 = vmatpush1.msra.mxu0 %v85
    %151 = vmatprep.subr.mxu0 %v88
    %152 = vmatpush1.msra.mxu0 %v87
    %153 = vmatprep.subr.mxu0 %v90
    %154 = vmatpush1.msra.mxu0 %v89
    %155 = vmatprep.subr.mxu0 %v92
    %156 = vmatpush1.msra.mxu0 %v91
    %157 = vmatprep.subr.mxu0 %v94
    %158 = vmatpush1.msra.mxu0 %v93
    %159 = vmatprep.subr.mxu0 %v96
    %160 = vmatpush1.msra.mxu0 %v95
    %161 = vmatprep.subr.mxu0 %v98
    %162 = vmatpush1.msra.mxu0 %v97
    %163 = vmatprep.subr.mxu0 %v100
    %164 = vmatpush1.msra.mxu0 %v99
    %165 = vmatprep.subr.mxu0 %v102
    %166 = vmatpush1.msra.mxu0 %v101
    %167 = vmatprep.subr.mxu0 %v104
    %168 = vmatpush1.msra.mxu0 %v103
    %169 = vmatprep.subr.mxu0 %v106
    %170 = vmatpush1.msra.mxu0 %v105
    %171 = vmatprep.subr.mxu0 %v108
    %172 = vmatpush1.msra.mxu0 %v107
    %173 = vmatprep.subr.mxu0 %v110
    %174 = vmatpush1.msra.mxu0 %v109
    %175 = vmatprep.subr.mxu0 %v112
    %176 = vmatpush1.msra.mxu0 %v111
    %177 = vmatprep.subr.mxu0 %v114
    %178 = vmatpush1.msra.mxu0 %v113
    %179 = vmatprep.subr.mxu0 %v116
    %180 = vmatpush1.msra.mxu0 %v115
    %181 = vmatprep.subr.mxu0 %v118
    %182 = vmatpush1.msra.mxu0 %v117
    %183 = vmatprep.subr.mxu0 %v120
    %184 = vmatpush1.msra.mxu0 %v119
    %185 = vmatprep.subr.mxu0 %v122
    %186 = vmatpush1.msra.mxu0 %v121
    %187 = vmatprep.mubr.f32.mxu0 %v56
    %188 = vmatmul.mubr.f32.gmra.mrb[0].mxu0 %v55
    %v189 = vpop.f32.mrb[0].mxu0
    %v190 = vadd.f32 0.0, %v189
    %v191 = vpop.f32.mrb[0].mxu0
    %v192 = vadd.f32 0.0, %v191
    %193 = vmatprep.mubr.f32.mxu0 %v58
    %194 = vmatmul.mubr.f32.gmra.mrb[0].mxu0 %v57
    %v195 = vpop.f32.mrb[0].mxu0
    %v196 = vadd.f32 0.0, %v195
    %v197 = vpop.f32.mrb[0].mxu0
    %v198 = vadd.f32 0.0, %v197
    %199 = vdwg.mxu0
    %v200 = vadd.f32 %v51, %v190
    %v201 = vadd.f32 %v52, %v192
    %v202 = vadd.f32 %v53, %v196
    %v203 = vadd.f32 %v54, %v198
    %204 = vst [vmem:[#allocation7] sm:$0xff] %v200
    %205 = vst [vmem:[#allocation7 + $0x8] sm:$0xff] %v201
    %206 = vst [vmem:[#allocation7 + $0x10] sm:$0xff] %v202
    %207 = vst [vmem:[#allocation7 + $0x18] sm:$0xff] %v203
    // Predicated region
    $region26: #{tpu_custom_call.1} parent=1 // pred_check
      %p208 = pneg %p43
    $region27: #{tpu_custom_call.1} parent=1 // pred_check_branch
      %210 = sbr.rel (%p208) target = $region29
    $region28: #{tpu_custom_call.1} parent=1 // pred_region
      %v211 = vld [vmem:[#allocation7] sm:$0xff]
      %v212 = vld [vmem:[#allocation7 + $0x8] sm:$0xff]
      %v213 = vld [vmem:[#allocation7 + $0x10] sm:$0xff]
      %v214 = vld [vmem:[#allocation7 + $0x18] sm:$0xff]
      %v215 = vld [vmem:[%s2] sm:$0x3]
      %v217 = vlaneseq
      %v218 = vshrl.u32 %v217, 7
      %v219 = vsub.s32 0, %v218
      %v220 = vrot.slane %v215, %v219
      %v221 = vlaneseq
      %v222 = vshrl.u32 %v221, 7
      %v223 = vsub.s32 1, %v222
      %v224 = vrot.slane %v215, %v223
      %v227 = vadd.f32 %v211, %v220
      %v228 = vadd.f32 %v212, %v224
      %v229 = vadd.f32 %v213, %v220
      %v230 = vadd.f32 %v214, %v224
      %231 = vst [vmem:[#allocation7] sm:$0xff] %v227
      %232 = vst [vmem:[#allocation7 + $0x8] sm:$0xff] %v228
      %233 = vst [vmem:[#allocation7 + $0x10] sm:$0xff] %v229
      %234 = vst [vmem:[#allocation7 + $0x18] sm:$0xff] %v230
    $region29: #{tpu_custom_call.1} parent=1 // pred_fallthru
      _
    // Predicated region
    $region30: #{tpu_custom_call.1} parent=1 // pred_check
      _
    $region31: #{tpu_custom_call.1} parent=1 // pred_check_branch
      %236 = sbr.rel (0) target = $region33
    $region32: #{tpu_custom_call.1} parent=1 // pred_region
      %s238 = ssub.s32 512, 512
      %239 = vsyncadd [#allocation4], %s238
      %s240 = sshll.u32 [#allocation7], 4
      %s241 = int_to_ptr.vmem [resolvable:$true] %s240
      %246 = dma.vmem_to_hbm [thread:$0]  %s241, 512, %s3, [#allocation4], 256, 256, 16
    $region33: #{tpu_custom_call.1} parent=1 // pred_fallthru
      _
    // Predicated region
    $region34: #{tpu_custom_call.1} parent=1 // pred_check
      _
    $region35: #{tpu_custom_call.1} parent=1 // pred_check_branch
      %248 = sbr.rel (0) target = $region37
    $region36: #{tpu_custom_call.1} parent=1 // pred_region
      %249 = dma.done [#allocation4], 512
    $region37: #{tpu_custom_call.1} parent=1 // pred_fallthru
      _
    %250 = vsyncpa [#allocation3], 1
    %251 = vsyncpa [#allocation6], 1
    %252 = vsyncpa [#allocation4], 1

</llo_original>
